<compile_context>
chip_gen: v7x
topology: tpu7x:2x2x1
jax: 0.10.0
libtpu: 0.0.40
codegen_flags: <defaults>
</compile_context>

<pallas_src>
import functools
import math

import jax
import jax.numpy as jnp
from jax import lax
from jax.experimental import pallas as pl
from jax.experimental.pallas import tpu as pltpu


def _pipeline_stage_kernel(x_ref, w1_ref, w2_ref, w3_ref, o_ref, y_acc,
                           *, compute_dtype, approximate_gelu):
    f = pl.program_id(1)

    @pl.when(f == 0)
    def _():
        y_acc[...] = jnp.zeros_like(y_acc)

    # linear1 chunk: x (TM, H) . w1_chunk (TF, H) contracted on in_features -> (TM, TF)
    h = lax.dot_general(
        x_ref[...], w1_ref[...],
        dimension_numbers=(((1,), (1,)), ((), ())),
        preferred_element_type=jnp.float32)

    if approximate_gelu:
        # tanh GELU -> EUP slot; numerics differ slightly from torch's exact GELU.
        h = jax.nn.gelu(h, approximate=True)
    else:
        # exact (erf) GELU, matches F.gelu default.
        h = 0.5 * h * (1.0 + lax.erf(h * (1.0 / math.sqrt(2.0))))

    # Cast back to the model dtype so linear2 runs the MXU at bf16 rate when the
    # inputs/weights are bf16 (accumulation stays f32 in y_acc).
    h = h.astype(compute_dtype)

    # linear2 chunk: h (TM, TF) . w2_chunk (H, TF) contracted on in_features -> (TM, H)
    y_acc[...] += lax.dot_general(
        h, w2_ref[...],
        dimension_numbers=(((1,), (1,)), ((), ())),
        preferred_element_type=jnp.float32)

    @pl.when(f == pl.num_programs(1) - 1)
    def _():
        y = y_acc[...].astype(compute_dtype)
        # linear3: y (TM, H) . w3 (H, H) contracted on in_features -> (TM, H)
        o_ref[...] = lax.dot_general(
            y, w3_ref[...],
            dimension_numbers=(((1,), (1,)), ((), ())),
            preferred_element_type=jnp.float32).astype(o_ref.dtype)


def _ff_tile(ff, target):
    """Largest multiple of 128 that divides ff and is <= target; else full ff."""
    if ff <= target:
        return ff
    cand = (target // 128) * 128
    while cand >= 128:
        if ff % cand == 0:
            return cand
        cand -= 128
    return ff


def _vmem_limit_bytes():
    # Per-generation headroom: <=100 MiB on v5e/v6e (128 MiB physical),
    # <=48 MiB on v7x (64 MiB physical).  Fall back conservatively.
    try:
        cap = pltpu.get_tpu_info().vmem_capacity_bytes
        return int(min(100 * 1024 * 1024, cap * 3 // 4))
    except Exception:
        return 48 * 1024 * 1024


def pipeline_stage_forward(x, w1, w2, w3, *, tm_target=256, tf_target=1024,
                           approximate_gelu=False):
    """x: (..., H); w1: (4H, H), w2: (H, 4H), w3: (H, H)  (PyTorch nn.Linear layout)."""
    orig_shape = x.shape
    hidden = orig_shape[-1]
    ff = 4 * hidden
    assert w1.shape == (ff, hidden)
    assert w2.shape == (hidden, ff)
    assert w3.shape == (hidden, hidden)

    x2d = x.reshape(-1, hidden)
    m = x2d.shape[0]

    # Token tile: multiple of 8 (or full M); FFN tile: multiple of 128 dividing 4H.
    tm = m if m <= tm_target else tm_target
    tf = _ff_tile(ff, tf_target)
    grid = (pl.cdiv(m, tm), ff // tf)

    itemsize = jnp.dtype(x2d.dtype).itemsize
    flops = 4 * m * hidden * ff + 2 * m * hidden * hidden
    bytes_accessed = (x2d.size + w1.size + w2.size + w3.size + m * hidden) * itemsize
    cost = pl.CostEstimate(flops=flops, transcendentals=m * ff,
                           bytes_accessed=bytes_accessed)

    kernel = functools.partial(_pipeline_stage_kernel,
                               compute_dtype=x2d.dtype,
                               approximate_gelu=approximate_gelu)

    out = pl.pallas_call(
        kernel,
        out_shape=jax.ShapeDtypeStruct((m, hidden), x.dtype),
        grid_spec=pltpu.PrefetchScalarGridSpec(
            num_scalar_prefetch=0,
            grid=grid,
            in_specs=[
                pl.BlockSpec((tm, hidden), lambda i, f: (i, 0)),      # x tile (resident over f)
                pl.BlockSpec((tf, hidden), lambda i, f: (f, 0)),      # w1 chunk (streams over f)
                pl.BlockSpec((hidden, tf), lambda i, f: (0, f)),      # w2 chunk (streams over f)
                pl.BlockSpec((hidden, hidden), lambda i, f: (0, 0)),  # w3 resident
            ],
            out_specs=pl.BlockSpec((tm, hidden), lambda i, f: (i, 0)),
            scratch_shapes=[pltpu.VMEM((tm, hidden), jnp.float32)],   # f32 y accumulator
        ),
        compiler_params=pltpu.CompilerParams(
            dimension_semantics=("parallel", "arbitrary"),
            vmem_limit_bytes=_vmem_limit_bytes(),
        ),
        cost_estimate=cost,
    )(x2d, w1, w2, w3)

    return out.reshape(orig_shape)


def _reference(x, w1, w2, w3):
    h = x @ w1.T
    h = 0.5 * h * (1.0 + lax.erf(h / jnp.sqrt(2.0)))
    y = h @ w2.T
    return y @ w3.T


if __name__ == "__main__":
    hidden = 32
    batch, seq = 2, 8

    key = jax.random.PRNGKey(0)
    kx, k1, k2, k3 = jax.random.split(key, 4)

    x = jax.random.normal(kx, (batch, seq, hidden), dtype=jnp.float32)
    # nn.Linear weight shape is (out_features, in_features); deterministic init.
    w1 = jax.random.normal(k1, (hidden * 4, hidden), dtype=jnp.float32) * 0.02
    w2 = jax.random.normal(k2, (hidden, hidden * 4), dtype=jnp.float32) * 0.02
    w3 = jax.random.normal(k3, (hidden, hidden), dtype=jnp.float32) * 0.02

    out = pipeline_stage_forward(x, w1, w2, w3)
    out = jax.block_until_ready(out)

    ref = _reference(x, w1, w2, w3)
    assert out.shape == ref.shape
    assert jnp.allclose(out, ref, atol=1e-5, rtol=1e-5), "mismatch vs reference"

    print("KERNEL_OK")
</pallas_src>

<mosaic_0001>
module attributes {stable_mosaic.version = 11 : i64} {
  func.func @_pipeline_stage_kernel(%arg0: i32, %arg1: i32, %arg2: memref<16x32xf32, #tpu.memory_space<vmem>>, %arg3: memref<128x32xf32, #tpu.memory_space<vmem>>, %arg4: memref<32x128xf32, #tpu.memory_space<vmem>>, %arg5: memref<32x32xf32, #tpu.memory_space<vmem>>, %arg6: memref<16x32xf32, #tpu.memory_space<vmem>>, %arg7: memref<16x32xf32, #tpu.memory_space<vmem>>) attributes {dimension_semantics = [#tpu.dimension_semantics<parallel>, #tpu.dimension_semantics<arbitrary>], iteration_bounds = array<i64: 1, 1>, scalar_prefetch = 0 : i64, scratch_operands = 1 : i64, tpu.core_type = #tpu.core_type<tc>, window_params = [{transform_indices = @transform_0, window_bounds = array<i64: 16, 32>}, {transform_indices = @transform_1, window_bounds = array<i64: 128, 32>}, {transform_indices = @transform_2, window_bounds = array<i64: 32, 128>}, {pipeline_mode = #tpu.pipeline_mode<synchronous>, transform_indices = @transform_3, window_bounds = array<i64: 32, 32>}, {transform_indices = @transform_4, window_bounds = array<i64: 16, 32>}]} {
    %c0_i32 = arith.constant 0 : i32
    %0 = arith.cmpi eq, %arg1, %c0_i32 : i32
    %1 = arith.extui %0 : i1 to i32
    %c0_i32_0 = arith.constant 0 : i32
    %2 = arith.cmpi ne, %1, %c0_i32_0 : i32
    scf.if %2 {
      %cst_16 = arith.constant 0.000000e+00 : f32
      %22 = vector.broadcast %cst_16 : f32 to vector<16x32xf32>
      %c0_17 = arith.constant 0 : index
      %c0_18 = arith.constant 0 : index
      %23 = vector.load %arg7[%c0_17, %c0_18] : memref<16x32xf32, #tpu.memory_space<vmem>>, vector<16x32xf32>
      tpu.vector_store %arg7[%c0_17, %c0_18], %22 {strides = array<i32>} : memref<16x32xf32, #tpu.memory_space<vmem>>, vector<16x32xf32>,
    } else {
    }
    %c0 = arith.constant 0 : index
    %c0_1 = arith.constant 0 : index
    %3 = vector.load %arg2[%c0, %c0_1] : memref<16x32xf32, #tpu.memory_space<vmem>>, vector<16x32xf32>
    %c0_2 = arith.constant 0 : index
    %c0_3 = arith.constant 0 : index
    %4 = vector.load %arg3[%c0_2, %c0_3] : memref<128x32xf32, #tpu.memory_space<vmem>>, vector<128x32xf32>
    %cst = arith.constant dense<0.000000e+00> : vector<16x128xf32>
    %5 = tpu.matmul %3, %4, %cst {dimension_numbers = #tpu.dot_dimension_numbers<[1], [1], [0], [0], [0, 0, 1, 0], [], []>} : vector<16x32xf32>, vector<128x32xf32>, vector<16x128xf32> -> vector<16x128xf32>
    %cst_4 = arith.constant 5.000000e-01 : f32
    %6 = vector.broadcast %cst_4 : f32 to vector<16x128xf32>
    %7 = arith.mulf %6, %5 : vector<16x128xf32>
    %cst_5 = arith.constant 0.707106769 : f32
    %8 = vector.broadcast %cst_5 : f32 to vector<16x128xf32>
    %9 = arith.mulf %5, %8 : vector<16x128xf32>
    %10 = math.erf %9 : vector<16x128xf32>
    %cst_6 = arith.constant 1.000000e+00 : f32
    %11 = vector.broadcast %cst_6 : f32 to vector<16x128xf32>
    %12 = arith.addf %11, %10 : vector<16x128xf32>
    %13 = arith.mulf %7, %12 : vector<16x128xf32>
    %c0_7 = arith.constant 0 : index
    %c0_8 = arith.constant 0 : index
    %14 = vector.load %arg7[%c0_7, %c0_8] : memref<16x32xf32, #tpu.memory_space<vmem>>, vector<16x32xf32>
    %c0_9 = arith.constant 0 : index
    %c0_10 = arith.constant 0 : index
    %15 = vector.load %arg4[%c0_9, %c0_10] : memref<32x128xf32, #tpu.memory_space<vmem>>, vector<32x128xf32>
    %cst_11 = arith.constant dense<0.000000e+00> : vector<16x32xf32>
    %16 = tpu.matmul %13, %15, %cst_11 {dimension_numbers = #tpu.dot_dimension_numbers<[1], [1], [0], [0], [0, 0, 1, 0], [], []>} : vector<16x128xf32>, vector<32x128xf32>, vector<16x32xf32> -> vector<16x32xf32>
    %17 = arith.addf %14, %16 : vector<16x32xf32>
    %c0_12 = arith.constant 0 : index
    %c0_13 = arith.constant 0 : index
    %18 = vector.load %arg7[%c0_12, %c0_13] : memref<16x32xf32, #tpu.memory_space<vmem>>, vector<16x32xf32>
    tpu.vector_store %arg7[%c0_12, %c0_13], %17 {strides = array<i32>} : memref<16x32xf32, #tpu.memory_space<vmem>>, vector<16x32xf32>,
    %c0_i32_14 = arith.constant 0 : i32
    %19 = arith.cmpi eq, %arg1, %c0_i32_14 : i32
    %20 = arith.extui %19 : i1 to i32
    %c0_i32_15 = arith.constant 0 : i32
    %21 = arith.cmpi ne, %20, %c0_i32_15 : i32
    scf.if %21 {
      %c0_16 = arith.constant 0 : index
      %c0_17 = arith.constant 0 : index
      %22 = vector.load %arg7[%c0_16, %c0_17] : memref<16x32xf32, #tpu.memory_space<vmem>>, vector<16x32xf32>
      %c0_18 = arith.constant 0 : index
      %c0_19 = arith.constant 0 : index
      %23 = vector.load %arg5[%c0_18, %c0_19] : memref<32x32xf32, #tpu.memory_space<vmem>>, vector<32x32xf32>
      %cst_20 = arith.constant dense<0.000000e+00> : vector<16x32xf32>
      %24 = tpu.matmul %22, %23, %cst_20 {dimension_numbers = #tpu.dot_dimension_numbers<[1], [1], [0], [0], [0, 0, 1, 0], [], []>} : vector<16x32xf32>, vector<32x32xf32>, vector<16x32xf32> -> vector<16x32xf32>
      %c0_21 = arith.constant 0 : index
      %c0_22 = arith.constant 0 : index
      %25 = vector.load %arg6[%c0_21, %c0_22] : memref<16x32xf32, #tpu.memory_space<vmem>>, vector<16x32xf32>
      tpu.vector_store %arg6[%c0_21, %c0_22], %24 {strides = array<i32>} : memref<16x32xf32, #tpu.memory_space<vmem>>, vector<16x32xf32>,
    } else {
    }
    return
  }
  func.func @transform_0(%arg0: i32, %arg1: i32) -> (i32, i32) {
    %c0_i32 = arith.constant 0 : i32
    %c0_i32_0 = arith.constant 0 : i32
    return %arg0, %c0_i32 : i32, i32
  }
  func.func @transform_1(%arg0: i32, %arg1: i32) -> (i32, i32) {
    %c0_i32 = arith.constant 0 : i32
    %c0_i32_0 = arith.constant 0 : i32
    return %arg1, %c0_i32 : i32, i32
  }
  func.func @transform_2(%arg0: i32, %arg1: i32) -> (i32, i32) {
    %c0_i32 = arith.constant 0 : i32
    %c0_i32_0 = arith.constant 0 : i32
    return %c0_i32, %arg1 : i32, i32
  }
  func.func @transform_3(%arg0: i32, %arg1: i32) -> (i32, i32) {
    %c0_i32 = arith.constant 0 : i32
    %c0_i32_0 = arith.constant 0 : i32
    %c0_i32_1 = arith.constant 0 : i32
    return %c0_i32, %c0_i32_0 : i32, i32
  }
  func.func @transform_4(%arg0: i32, %arg1: i32) -> (i32, i32) {
    %c0_i32 = arith.constant 0 : i32
    %c0_i32_0 = arith.constant 0 : i32
    return %arg0, %c0_i32 : i32, i32
  }
}

</mosaic_0001>

<llo_original>
// kernel: tpu_custom_call.1
$region0: #{tpu_custom_call.1}
  #allocation0 [shape = 'u32[]', space=smem, size = 0x4, offset = 0x4, fixed_abs, tag = 'smem constant byte address 0x4 - core index']
  #allocation1 [shape = 'u32[144,128]{1,0:T(1,128)}', space=vmem, size = 0x12000, scoped, tag = 'internal scratch']
  #allocation2 [shape = 'f32[16,32]{1,0:T(8,128)}', space=vmem, size = 0x2000, scoped, tag = 'scratch operand']
  %s0 = inlined_call_operand.vmem [shape: f32[16,32], index: 0, kind: input, shape index: {}]
  %s1 = inlined_call_operand.vmem [shape: f32[128,32], index: 1, kind: input, shape index: {}]
  %s2 = inlined_call_operand.vmem [shape: f32[32,128], index: 2, kind: input, shape index: {}]
  %s3 = inlined_call_operand.vmem [shape: f32[32,32], index: 3, kind: input, shape index: {}]
  %s4 = inlined_call_operand.hbm [shape: f32[16,32], index: 4, kind: output, shape index: {}]
  %s5 = sld [smem:[#allocation0]]
  $region34: #{tpu_custom_call.1} parent=0
    _
  %s7 = ssub.s32 1, %s5
  %s8 = scalar_select 0, %s7, %s5
  $region1: #{tpu_custom_call.1} parent=0
    #allocation3 [shape = 'u8[8192]{0}', space=vmem, size = 0x2000, scoped, tag = 'output window, operand 0, single buffered']
    #allocation4 [shape = 's32[1]{0}', space=sflag, size = 0x4, scoped, tag = 'scoped memory for tpu_custom_call.1']
    %9 = vsyncpa [#allocation4], 0
    // Predicated region
    $region2: #{tpu_custom_call.1} parent=1 // pred_check
      _
    $region3: #{tpu_custom_call.1} parent=1 // pred_check_branch
      %11 = sbr.rel (0) target = $region5
    $region4: #{tpu_custom_call.1} parent=1 // pred_region
      _
    $region5: #{tpu_custom_call.1} parent=1 // pred_fallthru
      _
    // Predicated region
    $region6: #{tpu_custom_call.1} parent=1 // pred_check
      _
    $region7: #{tpu_custom_call.1} parent=1 // pred_check_branch
      %13 = sbr.rel (0) target = $region9
    $region8: #{tpu_custom_call.1} parent=1 // pred_region
      _
    $region9: #{tpu_custom_call.1} parent=1 // pred_fallthru
      _
    // Predicated region
    $region10: #{tpu_custom_call.1} parent=1 // pred_check
      _
    $region11: #{tpu_custom_call.1} parent=1 // pred_check_branch
      %15 = sbr.rel (0) target = $region13
    $region12: #{tpu_custom_call.1} parent=1 // pred_region
      _
    $region13: #{tpu_custom_call.1} parent=1 // pred_fallthru
      _
    // Predicated region
    $region14: #{tpu_custom_call.1} parent=1 // pred_check
      _
    $region15: #{tpu_custom_call.1} parent=1 // pred_check_branch
      %17 = sbr.rel (0) target = $region17
    $region16: #{tpu_custom_call.1} parent=1 // pred_region
      _
    $region17: #{tpu_custom_call.1} parent=1 // pred_fallthru
      _
    %p18 = scmp.eq.s32.totalorder 0, 0
    // Predicated region
    $region18: #{tpu_custom_call.1} parent=1 // pred_check
      %p19 = pneg %p18
    $region19: #{tpu_custom_call.1} parent=1 // pred_check_branch
      %21 = sbr.rel (%p19) target = $region21
    $region20: #{tpu_custom_call.1} parent=1 // pred_region
      %vm22 = vcmask 261120
      %23 = vst.msk [vmem:[#allocation2] sm:$0xff] %vm22, 0.0
      %24 = vst.msk [vmem:[#allocation2 + $0x8] sm:$0xff] %vm22, 0.0
    $region21: #{tpu_custom_call.1} parent=1 // pred_fallthru
      _
    %v25 = vld [vmem:[%s0] sm:$0xff]
    %v26 = vld [vmem:[%s0 + $0x8] sm:$0xff]
    %v27 = vld [vmem:[%s1] sm:$0xff]
    %v28 = vld [vmem:[%s1 + $0x8] sm:$0xff]
    %v29 = vld [vmem:[%s1 + $0x10] sm:$0xff]
    %v30 = vld [vmem:[%s1 + $0x18] sm:$0xff]
    %v31 = vld [vmem:[%s1 + $0x20] sm:$0xff]
    %v32 = vld [vmem:[%s1 + $0x28] sm:$0xff]
    %v33 = vld [vmem:[%s1 + $0x30] sm:$0xff]
    %v34 = vld [vmem:[%s1 + $0x38] sm:$0xff]
    %v35 = vld [vmem:[%s1 + $0x40] sm:$0xff]
    %v36 = vld [vmem:[%s1 + $0x48] sm:$0xff]
    %v37 = vld [vmem:[%s1 + $0x50] sm:$0xff]
    %v38 = vld [vmem:[%s1 + $0x58] sm:$0xff]
    %v39 = vld [vmem:[%s1 + $0x60] sm:$0xff]
    %v40 = vld [vmem:[%s1 + $0x68] sm:$0xff]
    %v41 = vld [vmem:[%s1 + $0x70] sm:$0xff]
    %v42 = vld [vmem:[%s1 + $0x78] sm:$0xff]
    %vm43 = vcmask 261120
    %v45 = vsel %vm43, %v25, 0
    %v48 = vsel %vm43, %v26, 0
    %v51 = vsel %vm43, %v27, 0
    %v54 = vsel %vm43, %v28, 0
    %v57 = vsel %vm43, %v29, 0
    %v60 = vsel %vm43, %v30, 0
    %v63 = vsel %vm43, %v31, 0
    %v66 = vsel %vm43, %v32, 0
    %v69 = vsel %vm43, %v33, 0
    %v72 = vsel %vm43, %v34, 0
    %v75 = vsel %vm43, %v35, 0
    %v78 = vsel %vm43, %v36, 0
    %v81 = vsel %vm43, %v37, 0
    %v84 = vsel %vm43, %v38, 0
    %v87 = vsel %vm43, %v39, 0
    %v90 = vsel %vm43, %v40, 0
    %v93 = vsel %vm43, %v41, 0
    %v96 = vsel %vm43, %v42, 0
    %98 = vmatprep.subr.mxu0 0.0
    %99 = vmatpush1.xpose.msra.mxu0 %v51
    %100 = vmatprep.subr.mxu0 0.0
    %101 = vmatpush1.xpose.msra.mxu0 %v54
    %102 = vmatprep.subr.mxu0 0.0
    %103 = vmatpush1.xpose.msra.mxu0 %v57
    %104 = vmatprep.subr.mxu0 0.0
    %105 = vmatpush1.xpose.msra.mxu0 %v60
    %106 = vmatprep.subr.mxu0 0.0
    %107 = vmatpush1.xpose.msra.mxu0 %v63
    %108 = vmatprep.subr.mxu0 0.0
    %109 = vmatpush1.xpose.msra.mxu0 %v66
    %110 = vmatprep.subr.mxu0 0.0
    %111 = vmatpush1.xpose.msra.mxu0 %v69
    %112 = vmatprep.subr.mxu0 0.0
    %113 = vmatpush1.xpose.msra.mxu0 %v72
    %114 = vmatprep.subr.mxu0 0.0
    %115 = vmatpush1.xpose.msra.mxu0 %v75
    %116 = vmatprep.subr.mxu0 0.0
    %117 = vmatpush1.xpose.msra.mxu0 %v78
    %118 = vmatprep.subr.mxu0 0.0
    %119 = vmatpush1.xpose.msra.mxu0 %v81
    %120 = vmatprep.subr.mxu0 0.0
    %121 = vmatpush1.xpose.msra.mxu0 %v84
    %122 = vmatprep.subr.mxu0 0.0
    %123 = vmatpush1.xpose.msra.mxu0 %v87
    %124 = vmatprep.subr.mxu0 0.0
    %125 = vmatpush1.xpose.msra.mxu0 %v90
    %126 = vmatprep.subr.mxu0 0.0
    %127 = vmatpush1.xpose.msra.mxu0 %v93
    %128 = vmatprep.subr.mxu0 0.0
    %129 = vmatpush1.xpose.msra.mxu0 %v96
    %130 = vmatprep.subr.mxu0 0.0
    %131 = vmatpush1.xpose.msra.mxu0 0.0
    %132 = vmatprep.subr.mxu0 0.0
    %133 = vmatpush1.xpose.msra.mxu0 0.0
    %134 = vmatprep.subr.mxu0 0.0
    %135 = vmatpush1.xpose.msra.mxu0 0.0
    %136 = vmatprep.subr.mxu0 0.0
    %137 = vmatpush1.xpose.msra.mxu0 0.0
    %138 = vmatprep.subr.mxu0 0.0
    %139 = vmatpush1.xpose.msra.mxu0 0.0
    %140 = vmatprep.subr.mxu0 0.0
    %141 = vmatpush1.xpose.msra.mxu0 0.0
    %142 = vmatprep.subr.mxu0 0.0
    %143 = vmatpush1.xpose.msra.mxu0 0.0
    %144 = vmatprep.subr.mxu0 0.0
    %145 = vmatpush1.xpose.msra.mxu0 0.0
    %146 = vmatprep.subr.mxu0 0.0
    %147 = vmatpush1.xpose.msra.mxu0 0.0
    %148 = vmatprep.subr.mxu0 0.0
    %149 = vmatpush1.xpose.msra.mxu0 0.0
    %150 = vmatprep.subr.mxu0 0.0
    %151 = vmatpush1.xpose.msra.mxu0 0.0
    %152 = vmatprep.subr.mxu0 0.0
    %153 = vmatpush1.xpose.msra.mxu0 0.0
    %154 = vmatprep.subr.mxu0 0.0
    %155 = vmatpush1.xpose.msra.mxu0 0.0
    %156 = vmatprep.subr.mxu0 0.0
    %157 = vmatpush1.xpose.msra.mxu0 0.0
    %158 = vmatprep.subr.mxu0 0.0
    %159 = vmatpush1.xpose.msra.mxu0 0.0
    %160 = vmatprep.subr.mxu0 0.0
    %161 = vmatpush1.xpose.msra.mxu0 0.0
    %162 = vmatprep.mubr.f32.mxu0 0.0
    %163 = vmatmul.mubr.f32.gmra.mrb[0].mxu0 %v45
    %v164 = vpop.f32.mrb[0].mxu0
    %v165 = vadd.f32 0.0, %v164
    %v166 = vpop.f32.mrb[0].mxu0
    %167 = vmatprep.mubr.f32.mxu0 0.0
    %168 = vmatmul.mubr.f32.gmra.mrb[0].mxu0 %v48
    %v169 = vpop.f32.mrb[0].mxu0
    %v170 = vadd.f32 0.0, %v169
    %v171 = vpop.f32.mrb[0].mxu0
    %172 = vdwg.mxu0
    %v173 = vmul.f32 %v165, 0.5
    %v174 = vmul.f32 %v170, 0.5
    %v175 = vmul.f32 %v165, 0.70710677
    %v176 = vmul.f32 %v170, 0.70710677
    %v177 = verf.f32.pop %v175
    %v178 = verf.f32.pop %v176
    %v179 = vadd.f32 %v177, 1.0
    %v180 = vadd.f32 %v178, 1.0
    %v181 = vmul.f32 %v173, %v179
    %v182 = vmul.f32 %v174, %v180
    %v183 = vld [vmem:[#allocation2] sm:$0xff]
    %v184 = vld [vmem:[#allocation2 + $0x8] sm:$0xff]
    %v185 = vld [vmem:[%s2] sm:$0xff]
    %v186 = vld [vmem:[%s2 + $0x8] sm:$0xff]
    %v187 = vld [vmem:[%s2 + $0x10] sm:$0xff]
    %v188 = vld [vmem:[%s2 + $0x18] sm:$0xff]
    %189 = vmatprep.subr.mxu0 0.0
    %190 = vmatpush1.xpose.msra.mxu0 %v185
    %191 = vmatprep.subr.mxu0 0.0
    %192 = vmatpush1.xpose.msra.mxu0 %v186
    %193 = vmatprep.subr.mxu0 0.0
    %194 = vmatpush1.xpose.msra.mxu0 %v187
    %195 = vmatprep.subr.mxu0 0.0
    %196 = vmatpush1.xpose.msra.mxu0 %v188
    %197 = vmatprep.subr.mxu0 0.0
    %198 = vmatpush1.xpose.msra.mxu0 0.0
    %199 = vmatprep.subr.mxu0 0.0
    %200 = vmatpush1.xpose.msra.mxu0 0.0
    %201 = vmatprep.subr.mxu0 0.0
    %202 = vmatpush1.xpose.msra.mxu0 0.0
    %203 = vmatprep.subr.mxu0 0.0
    %204 = vmatpush1.xpose.msra.mxu0 0.0
    %205 = vmatprep.subr.mxu0 0.0
    %206 = vmatpush1.xpose.msra.mxu0 0.0
    %207 = vmatprep.subr.mxu0 0.0
    %208 = vmatpush1.xpose.msra.mxu0 0.0
    %209 = vmatprep.subr.mxu0 0.0
    %210 = vmatpush1.xpose.msra.mxu0 0.0
    %211 = vmatprep.subr.mxu0 0.0
    %212 = vmatpush1.xpose.msra.mxu0 0.0
    %213 = vmatprep.subr.mxu0 0.0
    %214 = vmatpush1.xpose.msra.mxu0 0.0
    %215 = vmatprep.subr.mxu0 0.0
    %216 = vmatpush1.xpose.msra.mxu0 0.0
    %217 = vmatprep.subr.mxu0 0.0
    %218 = vmatpush1.xpose.msra.mxu0 0.0
    %219 = vmatprep.subr.mxu0 0.0
    %220 = vmatpush1.xpose.msra.mxu0 0.0
    %221 = vmatprep.subr.mxu0 0.0
    %222 = vmatpush1.xpose.msra.mxu0 0.0
    %223 = vmatprep.subr.mxu0 0.0
    %224 = vmatpush1.xpose.msra.mxu0 0.0
    %225 = vmatprep.subr.mxu0 0.0
    %226 = vmatpush1.xpose.msra.mxu0 0.0
    %227 = vmatprep.subr.mxu0 0.0
    %228 = vmatpush1.xpose.msra.mxu0 0.0
    %229 = vmatprep.subr.mxu0 0.0
    %230 = vmatpush1.xpose.msra.mxu0 0.0
    %231 = vmatprep.subr.mxu0 0.0
    %232 = vmatpush1.xpose.msra.mxu0 0.0
    %233 = vmatprep.subr.mxu0 0.0
    %234 = vmatpush1.xpose.msra.mxu0 0.0
    %235 = vmatprep.subr.mxu0 0.0
    %236 = vmatpush1.xpose.msra.mxu0 0.0
    %237 = vmatprep.subr.mxu0 0.0
    %238 = vmatpush1.xpose.msra.mxu0 0.0
    %239 = vmatprep.subr.mxu0 0.0
    %240 = vmatpush1.xpose.msra.mxu0 0.0
    %241 = vmatprep.subr.mxu0 0.0
    %242 = vmatpush1.xpose.msra.mxu0 0.0
    %243 = vmatprep.subr.mxu0 0.0
    %244 = vmatpush1.xpose.msra.mxu0 0.0
    %245 = vmatprep.subr.mxu0 0.0
    %246 = vmatpush1.xpose.msra.mxu0 0.0
    %247 = vmatprep.subr.mxu0 0.0
    %248 = vmatpush1.xpose.msra.mxu0 0.0
    %249 = vmatprep.subr.mxu0 0.0
    %250 = vmatpush1.xpose.msra.mxu0 0.0
    %251 = vmatprep.subr.mxu0 0.0
    %252 = vmatpush1.xpose.msra.mxu0 0.0
    %253 = vmatprep.mubr.f32.mxu0 0.0
    %254 = vmatmul.mubr.f32.gmra.mrb[0].mxu0 %v181
    %v255 = vpop.f32.mrb[0].mxu0
    %v256 = vadd.f32 0.0, %v255
    %v257 = vpop.f32.mrb[0].mxu0
    %258 = vmatprep.mubr.f32.mxu0 0.0
    %259 = vmatmul.mubr.f32.gmra.mrb[0].mxu0 %v182
    %v260 = vpop.f32.mrb[0].mxu0
    %v261 = vadd.f32 0.0, %v260
    %v262 = vpop.f32.mrb[0].mxu0
    %263 = vdwg.mxu0
    %v264 = vadd.f32 %v183, %v256
    %v265 = vadd.f32 %v184, %v261
    %266 = vst.msk [vmem:[#allocation2] sm:$0xff] %vm43, %v264
    %267 = vst.msk [vmem:[#allocation2 + $0x8] sm:$0xff] %vm43, %v265
    // Predicated region
    $region22: #{tpu_custom_call.1} parent=1 // pred_check
      %p268 = pneg %p18
    $region23: #{tpu_custom_call.1} parent=1 // pred_check_branch
      %270 = sbr.rel (%p268) target = $region25
    $region24: #{tpu_custom_call.1} parent=1 // pred_region
      %v271 = vld [vmem:[#allocation2] sm:$0xff]
      %v272 = vld [vmem:[#allocation2 + $0x8] sm:$0xff]
      %v273 = vld [vmem:[%s3] sm:$0xff]
      %v274 = vld [vmem:[%s3 + $0x8] sm:$0xff]
      %v275 = vld [vmem:[%s3 + $0x10] sm:$0xff]
      %v276 = vld [vmem:[%s3 + $0x18] sm:$0xff]
      %v278 = vsel %vm43, %v271, 0
      %v281 = vsel %vm43, %v272, 0
      %v284 = vsel %vm43, %v273, 0
      %v287 = vsel %vm43, %v274, 0
      %v290 = vsel %vm43, %v275, 0
      %v293 = vsel %vm43, %v276, 0
      %295 = vmatprep.subr.mxu0 0.0
      %296 = vmatpush1.xpose.msra.mxu0 %v284
      %297 = vmatprep.subr.mxu0 0.0
      %298 = vmatpush1.xpose.msra.mxu0 %v287
      %299 = vmatprep.subr.mxu0 0.0
      %300 = vmatpush1.xpose.msra.mxu0 %v290
      %301 = vmatprep.subr.mxu0 0.0
      %302 = vmatpush1.xpose.msra.mxu0 %v293
      %303 = vmatprep.subr.mxu0 0.0
      %304 = vmatpush1.xpose.msra.mxu0 0.0
      %305 = vmatprep.subr.mxu0 0.0
      %306 = vmatpush1.xpose.msra.mxu0 0.0
      %307 = vmatprep.subr.mxu0 0.0
      %308 = vmatpush1.xpose.msra.mxu0 0.0
      %309 = vmatprep.subr.mxu0 0.0
      %310 = vmatpush1.xpose.msra.mxu0 0.0
      %311 = vmatprep.subr.mxu0 0.0
      %312 = vmatpush1.xpose.msra.mxu0 0.0
      %313 = vmatprep.subr.mxu0 0.0
      %314 = vmatpush1.xpose.msra.mxu0 0.0
      %315 = vmatprep.subr.mxu0 0.0
      %316 = vmatpush1.xpose.msra.mxu0 0.0
      %317 = vmatprep.subr.mxu0 0.0
      %318 = vmatpush1.xpose.msra.mxu0 0.0
      %319 = vmatprep.subr.mxu0 0.0
      %320 = vmatpush1.xpose.msra.mxu0 0.0
      %321 = vmatprep.subr.mxu0 0.0
      %322 = vmatpush1.xpose.msra.mxu0 0.0
      %323 = vmatprep.subr.mxu0 0.0
      %324 = vmatpush1.xpose.msra.mxu0 0.0
      %325 = vmatprep.subr.mxu0 0.0
      %326 = vmatpush1.xpose.msra.mxu0 0.0
      %327 = vmatprep.subr.mxu0 0.0
      %328 = vmatpush1.xpose.msra.mxu0 0.0
      %329 = vmatprep.subr.mxu0 0.0
      %330 = vmatpush1.xpose.msra.mxu0 0.0
      %331 = vmatprep.subr.mxu0 0.0
      %332 = vmatpush1.xpose.msra.mxu0 0.0
      %333 = vmatprep.subr.mxu0 0.0
      %334 = vmatpush1.xpose.msra.mxu0 0.0
      %335 = vmatprep.subr.mxu0 0.0
      %336 = vmatpush1.xpose.msra.mxu0 0.0
      %337 = vmatprep.subr.mxu0 0.0
      %338 = vmatpush1.xpose.msra.mxu0 0.0
      %339 = vmatprep.subr.mxu0 0.0
      %340 = vmatpush1.xpose.msra.mxu0 0.0
      %341 = vmatprep.subr.mxu0 0.0
      %342 = vmatpush1.xpose.msra.mxu0 0.0
      %343 = vmatprep.subr.mxu0 0.0
      %344 = vmatpush1.xpose.msra.mxu0 0.0
      %345 = vmatprep.subr.mxu0 0.0
      %346 = vmatpush1.xpose.msra.mxu0 0.0
      %347 = vmatprep.subr.mxu0 0.0
      %348 = vmatpush1.xpose.msra.mxu0 0.0
      %349 = vmatprep.subr.mxu0 0.0
      %350 = vmatpush1.xpose.msra.mxu0 0.0
      %351 = vmatprep.subr.mxu0 0.0
      %352 = vmatpush1.xpose.msra.mxu0 0.0
      %353 = vmatprep.subr.mxu0 0.0
      %354 = vmatpush1.xpose.msra.mxu0 0.0
      %355 = vmatprep.subr.mxu0 0.0
      %356 = vmatpush1.xpose.msra.mxu0 0.0
      %357 = vmatprep.subr.mxu0 0.0
      %358 = vmatpush1.xpose.msra.mxu0 0.0
      %359 = vmatprep.mubr.f32.mxu0 0.0
      %360 = vmatmul.mubr.f32.gmra.mrb[0].mxu0 %v278
      %v361 = vpop.f32.mrb[0].mxu0
      %v362 = vadd.f32 0.0, %v361
      %v363 = vpop.f32.mrb[0].mxu0
      %364 = vmatprep.mubr.f32.mxu0 0.0
      %365 = vmatmul.mubr.f32.gmra.mrb[0].mxu0 %v281
      %v366 = vpop.f32.mrb[0].mxu0
      %v367 = vadd.f32 0.0, %v366
      %v368 = vpop.f32.mrb[0].mxu0
      %369 = vdwg.mxu0
      %370 = vst.msk [vmem:[#allocation3] sm:$0xff] %vm43, %v362
      %371 = vst.msk [vmem:[#allocation3 + $0x8] sm:$0xff] %vm43, %v367
    $region25: #{tpu_custom_call.1} parent=1 // pred_fallthru
      _
    // Predicated region
    $region26: #{tpu_custom_call.1} parent=1 // pred_check
      _
    $region27: #{tpu_custom_call.1} parent=1 // pred_check_branch
      %373 = sbr.rel (0) target = $region29
    $region28: #{tpu_custom_call.1} parent=1 // pred_region
      %s375 = ssub.s32 256, 256
      %376 = vsyncadd [#allocation4], %s375
      %s377 = sshll.u32 [#allocation3], 4
      %s378 = int_to_ptr.vmem [resolvable:$true] %s377
      %383 = dma.vmem_to_hbm [thread:$0]  %s378, 256, %s4, [#allocation4], 128, 128, 8
    $region29: #{tpu_custom_call.1} parent=1 // pred_fallthru
      _
    // Predicated region
    $region30: #{tpu_custom_call.1} parent=1 // pred_check
      _
    $region31: #{tpu_custom_call.1} parent=1 // pred_check_branch
      %385 = sbr.rel (0) target = $region33
    $region32: #{tpu_custom_call.1} parent=1 // pred_region
      %386 = dma.done [#allocation4], 256
    $region33: #{tpu_custom_call.1} parent=1 // pred_fallthru
      _
    %387 = vsyncpa [#allocation4], 1

</llo_original>
